<compile_context>
chip_gen: v6e
topology: v6e:2x2x1
jax: 0.10.0
libtpu: 0.0.40
codegen_flags: <defaults>
</compile_context>

<pallas_src>
import jax
import jax.numpy as jnp
from jax.experimental import pallas as pl
from jax.experimental.pallas import tpu as pltpu

IN_DIM = 100
HID_DIM = 50
HID_PAD = 128     # hidden dim padded to a full lane width
OUT_DIM = 10

TB_MAX = 8192     # max batch-tile rows (multiple of 8); x double-buffer ~3.3 MB bf16


def _round_up(n, m):
    return ((n + m - 1) // m) * m


def _pick_tb(b8):
    """Pick a batch tile (multiple of 8).  Small batches: one tile.  Large
    batches: >= 4 grid steps so v7x's two TensorCores each get work and the
    x DMA pipelines, capped at TB_MAX."""
    if b8 <= 2048:
        return b8
    tb = _round_up(-(-b8 // 4), 8)       # ~b8/4, rounded up to sublane multiple
    return min(TB_MAX, tb)


def _server_mlp_kernel(x_ref, w1_ref, b1_ref, w2_ref, b2_ref, o_ref):
    # Fused: Linear -> ReLU -> Linear -> LogSoftmax on the VMEM-resident tile.
    x = x_ref[...]                                          # (TB, 100) bf16

    # Linear(100 -> 128 padded), f32 accumulate; bias + ReLU in f32 (VPU).
    h = jnp.dot(x, w1_ref[...], preferred_element_type=jnp.float32)
    h = jnp.maximum(h + b1_ref[...], 0.0)
    # Keep h bf16 between the two matmuls (padded columns are exactly 0).
    h = h.astype(jnp.bfloat16)

    # Linear(128 padded -> 10), f32 accumulate (padded w2 rows are 0 -> exact).
    logits = jnp.dot(h, w2_ref[...], preferred_element_type=jnp.float32) + b2_ref[...]

    # Numerically-stable LogSoftmax over dim=1 (all f32).
    m = jnp.max(logits, axis=-1, keepdims=True)
    s = logits - m
    lse = jnp.log(jnp.sum(jnp.exp(s), axis=-1, keepdims=True))
    o_ref[...] = (s - lse).astype(o_ref.dtype)


def prepare_params(w1, b1, w2, b2):
    """One-time parameter prep: zero-pad hidden dim 50 -> 128 and cast the
    matmul operands to bf16 so every forward call gets weights already in
    their final layout/dtype (no per-call pad/copy ops).

    w1: [100, 50], b1: [50], w2: [50, 10], b2: [10]  (weights stored as
    [in, out], i.e. pre-transposed relative to PyTorch's [out, in])."""
    w1p = jnp.zeros((IN_DIM, HID_PAD), jnp.float32).at[:, :HID_DIM].set(w1)
    w2p = jnp.zeros((HID_PAD, OUT_DIM), jnp.float32).at[:HID_DIM, :].set(w2)
    b1p = jnp.zeros((1, HID_PAD), jnp.float32).at[:, :HID_DIM].set(b1)
    b2p = b2.reshape(1, OUT_DIM).astype(jnp.float32)
    return (w1p.astype(jnp.bfloat16), b1p, w2p.astype(jnp.bfloat16), b2p)


def server_model_forward(x, prepared):
    """x: [B, 100] float32 -> log-probabilities [B, 10] float32."""
    w1p, b1p, w2p, b2p = prepared
    B = x.shape[0]

    # Batch tiling: round rows to a multiple of 8, pick the tile, then pad to
    # a whole number of tiles so every block is fully in-bounds.
    b8 = _round_up(B, 8)
    tb = _pick_tb(b8)
    pad_b = _round_up(b8, tb)

    x_in = x.astype(jnp.bfloat16)            # bf16 MXU operand, halves x HBM read
    if pad_b != B:
        x_in = jnp.pad(x_in, ((0, pad_b - B), (0, 0)))

    out = pl.pallas_call(
        _server_mlp_kernel,
        out_shape=jax.ShapeDtypeStruct((pad_b, OUT_DIM), jnp.float32),
        grid=(pl.cdiv(pad_b, tb),),
        in_specs=[
            pl.BlockSpec((tb, IN_DIM), lambda i: (i, 0)),        # x: tiled over batch
            pl.BlockSpec((IN_DIM, HID_PAD), lambda i: (0, 0)),   # weights/biases:
            pl.BlockSpec((1, HID_PAD), lambda i: (0, 0)),        #   constant blocks,
            pl.BlockSpec((HID_PAD, OUT_DIM), lambda i: (0, 0)),  #   VMEM-resident
            pl.BlockSpec((1, OUT_DIM), lambda i: (0, 0)),        #   across the grid
        ],
        out_specs=pl.BlockSpec((tb, OUT_DIM), lambda i: (i, 0)),
        compiler_params=pltpu.CompilerParams(
            # Independent batch tiles -> shard across both v7x TensorCores.
            dimension_semantics=("parallel",),
        ),
    )(x_in, w1p, b1p, w2p, b2p)

    return out[:B] if pad_b != B else out


def init_params(key):
    """Deterministic PyTorch-style init: U(-1/sqrt(fan_in), 1/sqrt(fan_in))."""
    k1, k2, k3, k4 = jax.random.split(key, 4)
    bnd1 = 1.0 / jnp.sqrt(jnp.float32(IN_DIM))
    bnd2 = 1.0 / jnp.sqrt(jnp.float32(HID_DIM))
    # Stored as [in, out] (transpose of PyTorch's [out, in]).
    w1 = jax.random.uniform(k1, (IN_DIM, HID_DIM), jnp.float32, -bnd1, bnd1)
    b1 = jax.random.uniform(k2, (HID_DIM,), jnp.float32, -bnd1, bnd1)
    w2 = jax.random.uniform(k3, (HID_DIM, OUT_DIM), jnp.float32, -bnd2, bnd2)
    b2 = jax.random.uniform(k4, (OUT_DIM,), jnp.float32, -bnd2, bnd2)
    return w1, b1, w2, b2


def _reference_forward_f32(x, w1, b1, w2, b2):
    h = jnp.maximum(x @ w1 + b1, 0.0)
    logits = h @ w2 + b2
    return jax.nn.log_softmax(logits, axis=1)


def _reference_forward_bf16(x, w1, b1, w2, b2):
    """Reference matching the kernel's bf16-operand / f32-accumulate numerics."""
    xb = x.astype(jnp.bfloat16)
    w1b = w1.astype(jnp.bfloat16)
    w2b = w2.astype(jnp.bfloat16)
    h = jnp.dot(xb, w1b, preferred_element_type=jnp.float32) + b1
    h = jnp.maximum(h, 0.0).astype(jnp.bfloat16)
    logits = jnp.dot(h, w2b, preferred_element_type=jnp.float32) + b2
    return jax.nn.log_softmax(logits, axis=1)


if __name__ == "__main__":
    key = jax.random.PRNGKey(0)
    kx, kp = jax.random.split(key)

    batch = 8
    x = jax.random.normal(kx, (batch, IN_DIM), dtype=jnp.float32)
    w1, b1, w2, b2 = init_params(kp)

    prepared = prepare_params(w1, b1, w2, b2)       # one-time layout/dtype prep
    out = server_model_forward(x, prepared)
    out = jax.block_until_ready(out)

    assert out.shape == (batch, OUT_DIM)

    # Tight check vs a reference using the same bf16-operand numerics.
    ref_bf16 = _reference_forward_bf16(x, w1, b1, w2, b2)
    assert jnp.allclose(out, ref_bf16, atol=2e-3, rtol=2e-3), "mismatch vs bf16 reference"

    # Loose sanity check vs the pure-f32 reference (bf16 operand rounding).
    ref_f32 = _reference_forward_f32(x, w1, b1, w2, b2)
    assert jnp.allclose(out, ref_f32, atol=5e-2, rtol=5e-2), "mismatch vs f32 reference"

    print("KERNEL_OK")
</pallas_src>

<mosaic_0001>
module attributes {stable_mosaic.version = 11 : i64} {
  func.func @_server_mlp_kernel(%arg0: i32, %arg1: memref<8x100xbf16, #tpu.memory_space<vmem>>, %arg2: memref<100x128xbf16, #tpu.memory_space<vmem>>, %arg3: memref<1x128xf32, #tpu.memory_space<vmem>>, %arg4: memref<128x10xbf16, #tpu.memory_space<vmem>>, %arg5: memref<1x10xf32, #tpu.memory_space<vmem>>, %arg6: memref<8x10xf32, #tpu.memory_space<vmem>>) attributes {dimension_semantics = [#tpu.dimension_semantics<parallel>], iteration_bounds = array<i64: 1>, scalar_prefetch = 0 : i64, scratch_operands = 0 : i64, tpu.core_type = #tpu.core_type<tc>, window_params = [{transform_indices = @transform_0, window_bounds = array<i64: 8, 100>}, {pipeline_mode = #tpu.pipeline_mode<synchronous>, transform_indices = @transform_1, window_bounds = array<i64: 100, 128>}, {pipeline_mode = #tpu.pipeline_mode<synchronous>, transform_indices = @transform_2, window_bounds = array<i64: 1, 128>}, {pipeline_mode = #tpu.pipeline_mode<synchronous>, transform_indices = @transform_3, window_bounds = array<i64: 128, 10>}, {pipeline_mode = #tpu.pipeline_mode<synchronous>, transform_indices = @transform_4, window_bounds = array<i64: 1, 10>}, {transform_indices = @transform_5, window_bounds = array<i64: 8, 10>}]} {
    %c0 = arith.constant 0 : index
    %c0_0 = arith.constant 0 : index
    %0 = vector.load %arg1[%c0, %c0_0] : memref<8x100xbf16, #tpu.memory_space<vmem>>, vector<8x100xbf16>
    %c0_1 = arith.constant 0 : index
    %c0_2 = arith.constant 0 : index
    %1 = vector.load %arg2[%c0_1, %c0_2] : memref<100x128xbf16, #tpu.memory_space<vmem>>, vector<100x128xbf16>
    %cst = arith.constant dense<0.000000e+00> : vector<8x128xf32>
    %2 = tpu.matmul %0, %1, %cst {dimension_numbers = #tpu.dot_dimension_numbers<[1], [0], [0], [1], [0, 0, 1, 1], [], []>} : vector<8x100xbf16>, vector<100x128xbf16>, vector<8x128xf32> -> vector<8x128xf32>
    %c0_3 = arith.constant 0 : index
    %c0_4 = arith.constant 0 : index
    %3 = vector.load %arg3[%c0_3, %c0_4] : memref<1x128xf32, #tpu.memory_space<vmem>>, vector<1x128xf32>
    %4 = vector.broadcast %3 : vector<1x128xf32> to vector<8x128xf32>
    %5 = arith.addf %2, %4 : vector<8x128xf32>
    %cst_5 = arith.constant 0.000000e+00 : f32
    %6 = vector.broadcast %cst_5 : f32 to vector<8x128xf32>
    %7 = arith.maximumf %5, %6 : vector<8x128xf32>
    %8 = arith.truncf %7 : vector<8x128xf32> to vector<8x128xbf16>
    %c0_6 = arith.constant 0 : index
    %c0_7 = arith.constant 0 : index
    %9 = vector.load %arg4[%c0_6, %c0_7] : memref<128x10xbf16, #tpu.memory_space<vmem>>, vector<128x10xbf16>
    %cst_8 = arith.constant dense<0.000000e+00> : vector<8x10xf32>
    %10 = tpu.matmul %8, %9, %cst_8 {dimension_numbers = #tpu.dot_dimension_numbers<[1], [0], [0], [1], [0, 0, 1, 1], [], []>} : vector<8x128xbf16>, vector<128x10xbf16>, vector<8x10xf32> -> vector<8x10xf32>
    %c0_9 = arith.constant 0 : index
    %c0_10 = arith.constant 0 : index
    %11 = vector.load %arg5[%c0_9, %c0_10] : memref<1x10xf32, #tpu.memory_space<vmem>>, vector<1x10xf32>
    %12 = vector.broadcast %11 : vector<1x10xf32> to vector<8x10xf32>
    %13 = arith.addf %10, %12 : vector<8x10xf32>
    %cst_11 = arith.constant dense<0xFF800000> : vector<8xf32>
    %14 = vector.multi_reduction <maximumf>, %13, %cst_11 [1] : vector<8x10xf32> to vector<8xf32>
    %15 = vector.shape_cast %14 : vector<8xf32> to vector<8x1xf32>
    %16 = vector.broadcast %15 : vector<8x1xf32> to vector<8x10xf32>
    %17 = arith.subf %13, %16 : vector<8x10xf32>
    %18 = math.exp %17 : vector<8x10xf32>
    %cst_12 = arith.constant dense<0.000000e+00> : vector<8xf32>
    %19 = vector.multi_reduction <add>, %18, %cst_12 [1] : vector<8x10xf32> to vector<8xf32>
    %20 = vector.shape_cast %19 : vector<8xf32> to vector<8x1xf32>
    %21 = math.log %20 : vector<8x1xf32>
    %22 = vector.broadcast %21 : vector<8x1xf32> to vector<8x10xf32>
    %23 = arith.subf %17, %22 : vector<8x10xf32>
    %c0_13 = arith.constant 0 : index
    %c0_14 = arith.constant 0 : index
    %24 = vector.load %arg6[%c0_13, %c0_14] : memref<8x10xf32, #tpu.memory_space<vmem>>, vector<8x10xf32>
    tpu.vector_store %arg6[%c0_13, %c0_14], %23 {strides = array<i32>} : memref<8x10xf32, #tpu.memory_space<vmem>>, vector<8x10xf32>,
    return
  }
  func.func @transform_0(%arg0: i32) -> (i32, i32) {
    %c0_i32 = arith.constant 0 : i32
    %c0_i32_0 = arith.constant 0 : i32
    return %arg0, %c0_i32 : i32, i32
  }
  func.func @transform_1(%arg0: i32) -> (i32, i32) {
    %c0_i32 = arith.constant 0 : i32
    %c0_i32_0 = arith.constant 0 : i32
    %c0_i32_1 = arith.constant 0 : i32
    return %c0_i32, %c0_i32_0 : i32, i32
  }
  func.func @transform_2(%arg0: i32) -> (i32, i32) {
    %c0_i32 = arith.constant 0 : i32
    %c0_i32_0 = arith.constant 0 : i32
    %c0_i32_1 = arith.constant 0 : i32
    return %c0_i32, %c0_i32_0 : i32, i32
  }
  func.func @transform_3(%arg0: i32) -> (i32, i32) {
    %c0_i32 = arith.constant 0 : i32
    %c0_i32_0 = arith.constant 0 : i32
    %c0_i32_1 = arith.constant 0 : i32
    return %c0_i32, %c0_i32_0 : i32, i32
  }
  func.func @transform_4(%arg0: i32) -> (i32, i32) {
    %c0_i32 = arith.constant 0 : i32
    %c0_i32_0 = arith.constant 0 : i32
    %c0_i32_1 = arith.constant 0 : i32
    return %c0_i32, %c0_i32_0 : i32, i32
  }
  func.func @transform_5(%arg0: i32) -> (i32, i32) {
    %c0_i32 = arith.constant 0 : i32
    %c0_i32_0 = arith.constant 0 : i32
    return %arg0, %c0_i32 : i32, i32
  }
}

</mosaic_0001>

<llo_original>
// kernel: tpu_custom_call.1
$region0: #{tpu_custom_call.1}
  #allocation0 [shape = 'u32[]', space=smem, size = 0x4, offset = 0x4, fixed_abs, tag = 'smem constant byte address 0x4 - core index']
  #allocation1 [shape = 'u32[144,128]{1,0:T(1,128)}', space=vmem, size = 0x12000, scoped, tag = 'internal scratch']
  %s0 = inlined_call_operand.vmem [shape: bf16[8,100], index: 0, kind: input, shape index: {}]
  %s1 = inlined_call_operand.vmem [shape: bf16[100,128], index: 1, kind: input, shape index: {}]
  %s2 = inlined_call_operand.vmem [shape: f32[1,128], index: 2, kind: input, shape index: {}]
  %s3 = inlined_call_operand.vmem [shape: bf16[128,10], index: 3, kind: input, shape index: {}]
  %s4 = inlined_call_operand.vmem [shape: f32[1,10], index: 4, kind: input, shape index: {}]
  %s5 = inlined_call_operand.hbm [shape: f32[8,10], index: 5, kind: output, shape index: {}]
  %s6 = sld [smem:[#allocation0]]
  $region30: #{tpu_custom_call.1} parent=0
    _
  %s8 = ssub.s32 1, %s6
  %s9 = scalar_select 0, %s8, %s6
  $region1: #{tpu_custom_call.1} parent=0
    #allocation2 [shape = 'u8[4096]{0}', space=vmem, size = 0x1000, scoped, tag = 'output window, operand 0, single buffered']
    #allocation3 [shape = 's32[1]{0}', space=sflag, size = 0x4, scoped, tag = 'scoped memory for tpu_custom_call.1']
    %10 = vsyncpa [#allocation3], 0
    // Predicated region
    $region2: #{tpu_custom_call.1} parent=1 // pred_check
      _
    $region3: #{tpu_custom_call.1} parent=1 // pred_check_branch
      %12 = sbr.rel (0) target = $region5
    $region4: #{tpu_custom_call.1} parent=1 // pred_region
      _
    $region5: #{tpu_custom_call.1} parent=1 // pred_fallthru
      _
    // Predicated region
    $region6: #{tpu_custom_call.1} parent=1 // pred_check
      _
    $region7: #{tpu_custom_call.1} parent=1 // pred_check_branch
      %14 = sbr.rel (0) target = $region9
    $region8: #{tpu_custom_call.1} parent=1 // pred_region
      _
    $region9: #{tpu_custom_call.1} parent=1 // pred_fallthru
      _
    // Predicated region
    $region10: #{tpu_custom_call.1} parent=1 // pred_check
      _
    $region11: #{tpu_custom_call.1} parent=1 // pred_check_branch
      %16 = sbr.rel (0) target = $region13
    $region12: #{tpu_custom_call.1} parent=1 // pred_region
      _
    $region13: #{tpu_custom_call.1} parent=1 // pred_fallthru
      _
    // Predicated region
    $region14: #{tpu_custom_call.1} parent=1 // pred_check
      _
    $region15: #{tpu_custom_call.1} parent=1 // pred_check_branch
      %18 = sbr.rel (0) target = $region17
    $region16: #{tpu_custom_call.1} parent=1 // pred_region
      _
    $region17: #{tpu_custom_call.1} parent=1 // pred_fallthru
      _
    // Predicated region
    $region18: #{tpu_custom_call.1} parent=1 // pred_check
      _
    $region19: #{tpu_custom_call.1} parent=1 // pred_check_branch
      %20 = sbr.rel (0) target = $region21
    $region20: #{tpu_custom_call.1} parent=1 // pred_region
      _
    $region21: #{tpu_custom_call.1} parent=1 // pred_fallthru
      _
    %v22 = vld [vmem:[%s0] sm:$0xf]
    %v23 = vld [vmem:[%s1] sm:$0xf]
    %v24 = vld [vmem:[%s1 + $0x4] sm:$0xf]
    %v25 = vld [vmem:[%s1 + $0x8] sm:$0xf]
    %v26 = vld [vmem:[%s1 + $0xc] sm:$0xf]
    %v27 = vld [vmem:[%s1 + $0x10] sm:$0xf]
    %v28 = vld [vmem:[%s1 + $0x14] sm:$0xf]
    %v29 = vld [vmem:[%s1 + $0x18] sm:$0xf]
    %v30 = vld [vmem:[%s1 + $0x1c] sm:$0xf]
    %v31 = vld [vmem:[%s1 + $0x20] sm:$0xf]
    %v32 = vld [vmem:[%s1 + $0x24] sm:$0xf]
    %v33 = vld [vmem:[%s1 + $0x28] sm:$0xf]
    %v34 = vld [vmem:[%s1 + $0x2c] sm:$0xf]
    %v35 = vld [vmem:[%s1 + $0x30] sm:$0x3]
    %v36 = vld [vmem:[%s2] sm:$0x1]
    %v38 = vlaneseq
    %v39 = vshrl.u32 %v38, 7
    %v40 = vsub.s32 0, %v39
    %v41 = vrot.slane %v36, %v40
    %v56 = vunpack.c.l.b16 %v23
    %v57 = vunpack.c.l.b16 %v24
    %v58 = vunpack.c.l.b16 %v25
    %v59 = vunpack.c.l.b16 %v26
    %v60 = vunpack.c.l.b16 %v27
    %v61 = vunpack.c.l.b16 %v28
    %v62 = vunpack.c.l.b16 %v29
    %v63 = vunpack.c.l.b16 %v30
    %v64 = vunpack.c.l.b16 %v31
    %v65 = vunpack.c.l.b16 %v32
    %v66 = vunpack.c.l.b16 %v33
    %v67 = vunpack.c.l.b16 %v34
    %v68 = vunpack.c.l.b16 %v35
    %v69 = vpack.c.b16 %v57, %v56
    %v70 = vpack.c.b16 %v59, %v58
    %v71 = vpack.c.b16 %v61, %v60
    %v72 = vpack.c.b16 %v63, %v62
    %v73 = vpack.c.b16 %v65, %v64
    %v74 = vpack.c.b16 %v67, %v66
    %v75 = vpack.c.b16 %v68, %v68
    %vm82 = vcmask 818176
    %v84 = vsel %vm82, %v22, 0
    %vm86 = vcmask 1041408
    %v88 = vsel %vm86, %v75, 0
    %90 = vmatprep.subr.bf16.mxu0 0
    %91 = vmatpush1.bf16.msra.mxu0 0
    %92 = vmatprep.subr.bf16.mxu0 0
    %93 = vmatpush1.bf16.msra.mxu0 %v88
    %94 = vmatprep.subr.bf16.mxu0 0
    %95 = vmatpush1.bf16.msra.mxu0 %v74
    %96 = vmatprep.subr.bf16.mxu0 0
    %97 = vmatpush1.bf16.msra.mxu0 %v73
    %98 = vmatprep.subr.bf16.mxu0 0
    %99 = vmatpush1.bf16.msra.mxu0 %v72
    %100 = vmatprep.subr.bf16.mxu0 0
    %101 = vmatpush1.bf16.msra.mxu0 %v71
    %102 = vmatprep.subr.bf16.mxu0 0
    %103 = vmatpush1.bf16.msra.mxu0 %v70
    %104 = vmatprep.subr.bf16.mxu0 0
    %105 = vmatpush1.bf16.msra.mxu0 %v69
    %106 = vmatprep.subr.bf16.mxu0 0
    %107 = vmatpush2.bf16.msra.mxu0 0
    %108 = vmatprep.subr.bf16.mxu0 0
    %109 = vmatpush2.bf16.msra.mxu0 0
    %110 = vmatprep.subr.bf16.mxu0 0
    %111 = vmatpush2.bf16.msra.mxu0 0
    %112 = vmatprep.subr.bf16.mxu0 0
    %113 = vmatpush2.bf16.msra.mxu0 0
    %114 = vmatprep.subr.bf16.mxu0 0
    %115 = vmatpush2.bf16.msra.mxu0 0
    %116 = vmatprep.subr.bf16.mxu0 0
    %117 = vmatpush2.bf16.msra.mxu0 0
    %118 = vmatprep.subr.bf16.mxu0 0
    %119 = vmatpush2.bf16.msra.mxu0 0
    %120 = vmatprep.subr.bf16.mxu0 0
    %121 = vmatpush2.bf16.msra.mxu0 0
    %122 = vmatprep.mubr.bf16.mxu0 0
    %123 = vmatmul.mubr.bf16.gmra.mxu0 %v84
    %v124 = vpop.f32.mrf.mxu0
    %v125 = vadd.f32 %v41, %v124
    %v126 = vpop.f32.mrf.mxu0
    %v127 = vpop.f32.mrf.mxu0
    %v128 = vpop.f32.mrf.mxu0
    %129 = vdwg.mxu0
    %v130 = vmax.f32 %v125, 0.0
    %v131 = vpack.c.bf16 %v130, %v130
    %v132 = vld [vmem:[%s3] sm:$0xf]
    %v133 = vld [vmem:[%s3 + $0x4] sm:$0xf]
    %v134 = vld [vmem:[%s3 + $0x8] sm:$0xf]
    %v135 = vld [vmem:[%s3 + $0xc] sm:$0xf]
    %v136 = vld [vmem:[%s3 + $0x10] sm:$0xf]
    %v137 = vld [vmem:[%s3 + $0x14] sm:$0xf]
    %v138 = vld [vmem:[%s3 + $0x18] sm:$0xf]
    %v139 = vld [vmem:[%s3 + $0x1c] sm:$0xf]
    %v140 = vld [vmem:[%s3 + $0x20] sm:$0xf]
    %v141 = vld [vmem:[%s3 + $0x24] sm:$0xf]
    %v142 = vld [vmem:[%s3 + $0x28] sm:$0xf]
    %v143 = vld [vmem:[%s3 + $0x2c] sm:$0xf]
    %v144 = vld [vmem:[%s3 + $0x30] sm:$0xf]
    %v145 = vld [vmem:[%s3 + $0x34] sm:$0xf]
    %v146 = vld [vmem:[%s3 + $0x38] sm:$0xf]
    %v147 = vld [vmem:[%s3 + $0x3c] sm:$0xf]
    %v148 = vld [vmem:[%s4] sm:$0x1]
    %v150 = vlaneseq
    %v151 = vshrl.u32 %v150, 7
    %v152 = vsub.s32 0, %v151
    %v153 = vrot.slane %v148, %v152
    %v171 = vunpack.c.l.b16 %v132
    %v172 = vunpack.c.l.b16 %v133
    %v173 = vunpack.c.l.b16 %v134
    %v174 = vunpack.c.l.b16 %v135
    %v175 = vunpack.c.l.b16 %v136
    %v176 = vunpack.c.l.b16 %v137
    %v177 = vunpack.c.l.b16 %v138
    %v178 = vunpack.c.l.b16 %v139
    %v179 = vunpack.c.l.b16 %v140
    %v180 = vunpack.c.l.b16 %v141
    %v181 = vunpack.c.l.b16 %v142
    %v182 = vunpack.c.l.b16 %v143
    %v183 = vunpack.c.l.b16 %v144
    %v184 = vunpack.c.l.b16 %v145
    %v185 = vunpack.c.l.b16 %v146
    %v186 = vunpack.c.l.b16 %v147
    %v187 = vpack.c.b16 %v172, %v171
    %v188 = vpack.c.b16 %v174, %v173
    %v189 = vpack.c.b16 %v176, %v175
    %v190 = vpack.c.b16 %v178, %v177
    %v191 = vpack.c.b16 %v180, %v179
    %v192 = vpack.c.b16 %v182, %v181
    %v193 = vpack.c.b16 %v184, %v183
    %v194 = vpack.c.b16 %v186, %v185
    %203 = vmatprep.subr.bf16.mxu0 0
    %204 = vmatpush1.bf16.msra.mxu0 %v194
    %205 = vmatprep.subr.bf16.mxu0 0
    %206 = vmatpush1.bf16.msra.mxu0 %v193
    %207 = vmatprep.subr.bf16.mxu0 0
    %208 = vmatpush1.bf16.msra.mxu0 %v192
    %209 = vmatprep.subr.bf16.mxu0 0
    %210 = vmatpush1.bf16.msra.mxu0 %v191
    %211 = vmatprep.subr.bf16.mxu0 0
    %212 = vmatpush1.bf16.msra.mxu0 %v190
    %213 = vmatprep.subr.bf16.mxu0 0
    %214 = vmatpush1.bf16.msra.mxu0 %v189
    %215 = vmatprep.subr.bf16.mxu0 0
    %216 = vmatpush1.bf16.msra.mxu0 %v188
    %217 = vmatprep.subr.bf16.mxu0 0
    %218 = vmatpush1.bf16.msra.mxu0 %v187
    %219 = vmatprep.subr.bf16.mxu0 0
    %220 = vmatpush2.bf16.msra.mxu0 0
    %221 = vmatprep.subr.bf16.mxu0 0
    %222 = vmatpush2.bf16.msra.mxu0 0
    %223 = vmatprep.subr.bf16.mxu0 0
    %224 = vmatpush2.bf16.msra.mxu0 0
    %225 = vmatprep.subr.bf16.mxu0 0
    %226 = vmatpush2.bf16.msra.mxu0 0
    %227 = vmatprep.subr.bf16.mxu0 0
    %228 = vmatpush2.bf16.msra.mxu0 0
    %229 = vmatprep.subr.bf16.mxu0 0
    %230 = vmatpush2.bf16.msra.mxu0 0
    %231 = vmatprep.subr.bf16.mxu0 0
    %232 = vmatpush2.bf16.msra.mxu0 0
    %233 = vmatprep.subr.bf16.mxu0 0
    %234 = vmatpush2.bf16.msra.mxu0 0
    %235 = vmatprep.mubr.bf16.mxu0 0
    %236 = vmatmul.mubr.bf16.gmra.mxu0 %v131
    %v237 = vpop.f32.mrf.mxu0
    %v238 = vadd.f32 %v153, %v237
    %v239 = vpop.f32.mrf.mxu0
    %v240 = vpop.f32.mrf.mxu0
    %v241 = vpop.f32.mrf.mxu0
    %242 = vdwg.mxu0
    %vm243 = vcmask 80896
    %v244 = vsel %vm243, %v238, -inf
    %245 = vmax.xlane.f32.xlu0 %v244
    %v246 = vpop.xlane.xlu0 %245
    %v247 = vsub.f32 %v238, %v246
    %v248 = vmul.f32 %v247, 1.442695
    %v249 = vpow.pop %v248
    %v250 = vsel %vm243, %v249, 0.0
    %251 = vadd.xlane.f32.xlu0 %v250
    %v252 = vpop.xlane.xlu0 %251
    %v253 = vlog2.pop %v252
    %v254 = vmul.f32 %v253, 0.6931472
    %v255 = vsub.f32 %v247, %v254
    %256 = vst.msk [vmem:[#allocation2] sm:$0xff] %vm243, %v255
    // Predicated region
    $region22: #{tpu_custom_call.1} parent=1 // pred_check
      _
    $region23: #{tpu_custom_call.1} parent=1 // pred_check_branch
      %258 = sbr.rel (0) target = $region25
    $region24: #{tpu_custom_call.1} parent=1 // pred_region
      %s260 = ssub.s32 128, 128
      %261 = vsyncadd [#allocation3], %s260
      %s263 = sshll.u32 [#allocation2], 4
      %s264 = int_to_ptr.vmem [resolvable:$true] %s263
      %266 = dma.vmem_to_hbm [thread:$0]  %s264, 128, %s5, [#allocation3]
    $region25: #{tpu_custom_call.1} parent=1 // pred_fallthru
      _
    // Predicated region
    $region26: #{tpu_custom_call.1} parent=1 // pred_check
      _
    $region27: #{tpu_custom_call.1} parent=1 // pred_check_branch
      %268 = sbr.rel (0) target = $region29
    $region28: #{tpu_custom_call.1} parent=1 // pred_region
      %269 = dma.done [#allocation3], 128
    $region29: #{tpu_custom_call.1} parent=1 // pred_fallthru
      _
    %270 = vsyncpa [#allocation3], 1

</llo_original>
